<compile_context>
chip_gen: v6e
topology: v6e:2x2x1
jax: 0.10.0
libtpu: 0.0.40
codegen_flags: <defaults>
</compile_context>

<pallas_src>
from functools import partial

import jax
import jax.numpy as jnp
from jax.experimental import pallas as pl
from jax.experimental.pallas import tpu as pltpu


def _ceil_to(x, m):
    return -(-x // m) * m


def _down_sample_kernel(x_ref, sw_ref, b_ref, o_ref, *, expanded):
    # x_ref : [1, D, TL, K]    input slab, native [B, D, L, K] layout
    # sw_ref: [D, K, C]        folded (depthwise weight x block-sum selection)
    #                          C = D*Kout (expanded) or Kout (compact)
    # b_ref : [1, D*Kout]      bias, one entry per output lane
    # o_ref : [1, TL, D*Kout]  lane-dense output slab
    D = x_ref.shape[1]
    x = x_ref[0]                                           # [D, TL, K]
    # All D depthwise matmuls in a single batched MXU contraction; the
    # depthwise weight lives inside sw, so there is no VPU multiply here.
    y = jnp.einsum("dtk,dkc->dtc", x, sw_ref[...],
                   preferred_element_type=jnp.float32)
    if expanded:
        # Block-diagonal rhs: channel d already occupies lanes
        # [d*Kout, (d+1)*Kout), so the channel-axis sum is the dense slab.
        slab = jnp.sum(y, axis=0)                          # [TL, D*Kout]
    else:
        # Compact rhs: lane-interleave the D per-channel [TL, Kout] results.
        slab = jnp.concatenate([y[d] for d in range(D)], axis=-1)
    slab = slab + b_ref[...]                               # one full-width add
    o_ref[0] = slab.astype(o_ref.dtype)                    # one lane-dense store


def _vmem_budget():
    """(vmem_limit_bytes, pipeline_footprint_budget_bytes), per generation."""
    cap = None
    try:
        cap = getattr(pltpu.get_tpu_info(), "vmem_capacity_bytes", None)
    except Exception:
        cap = None
    if cap is not None and cap >= 128 * 1024 * 1024:
        # v5e / v6e: 128 MiB physical VMEM -> large tiles, high limit.
        return 96 * 1024 * 1024, 84 * 1024 * 1024
    # v7x (64 MiB per TC) or unknown: stay conservative.
    return 48 * 1024 * 1024, 40 * 1024 * 1024


def _choose_block_rows(B, L, D, K, C, Kout, x_itemsize, out_itemsize,
                       const_bytes, budget_bytes):
    """Largest TL dividing L that is a multiple of 8 (or == L) and whose
    padding-aware, double-buffered footprint fits the budget."""
    DKout = D * Kout

    def footprint(tl):
        tl_p = _ceil_to(tl, 8)
        x_blk = D * tl_p * _ceil_to(K, 128) * x_itemsize
        o_blk = tl_p * _ceil_to(DKout, 128) * out_itemsize
        # f32 matmul result + assembled slab held inside the kernel body.
        inter = (D * tl_p * _ceil_to(C, 128) * 4
                 + tl_p * _ceil_to(DKout, 128) * 4)
        return 2 * (x_blk + o_blk) + const_bytes + inter

    cands = sorted({t for t in range(8, L + 1, 8) if L % t == 0} | {L},
                   reverse=True)
    if B == 1:
        # Keep >= 2 grid steps on a parallel axis (v7x has 2 TCs per chip).
        multi = [t for t in cands if t < L]
        if multi:
            cands = multi
    for tl in cands:
        if footprint(tl) <= budget_bytes:
            return tl
    return min(cands)


def down_sample(x, weight, bias, kernel_size, *, block_rows=None,
                expanded=None, vmem_budget_bytes=None):
    """x: [B, D, L, K]; weight: [D, 1, k] (Conv1d groups=D); bias: [D].

    Returns (out [B*L, D, K // k], pad_value = K % k)."""
    B, D, L, K = x.shape
    k = int(kernel_size)
    pad_value = K % k
    Kout = K // k
    assert Kout >= 1, "segment length K must be >= kernel_size"
    Kt = Kout * k
    DKout = D * Kout

    # dtype policy: bf16 stays bf16 into the MXU (halves HBM bytes of x);
    # everything else computes in f32.  Accumulation is always f32.
    if x.dtype == jnp.bfloat16:
        op_dtype = jnp.bfloat16
    else:
        op_dtype = jnp.float32
        x = x.astype(jnp.float32)
    out_dtype = x.dtype

    # Fold the depthwise Conv1d weight into the block-sum selection matrix:
    #   sw[d, m, j] = w[d, m % k] * [m // k == j] * [m < Kt]
    # (the [m < Kt] mask drops the K % k tail exactly like Conv1d does).
    w = weight.reshape(D, k).astype(jnp.float32)              # [D, k]
    m = jnp.arange(K)
    wk = jnp.take(w, m % k, axis=1)                           # [D, K]
    sel = ((m[:, None] // k == jnp.arange(Kout)[None, :]) &
           (m[:, None] < Kt)).astype(jnp.float32)             # [K, Kout]
    sw = wk[:, :, None] * sel[None, :, :]                     # [D, K, Kout]

    # Choose the rhs flavour: "expanded" (block-diagonal -> MXU emits the
    # lane-dense slab directly) when it is small, else the compact rhs.
    if expanded is None:
        exp_rhs_bytes = (D * _ceil_to(K, 8) * _ceil_to(DKout, 128)
                         * jnp.dtype(op_dtype).itemsize)
        expanded = (exp_rhs_bytes <= (1 << 20)) and (DKout <= 512)
    if expanded:
        eye = jnp.eye(D, dtype=jnp.float32)
        sw = (sw[:, :, None, :] * eye[:, None, :, None]).reshape(D, K, DKout)
    C = sw.shape[-1]
    sw = sw.astype(op_dtype)

    # Bias as one [1, D*Kout] row: bias[d] repeated Kout times.
    b_row = jnp.repeat(bias.astype(jnp.float32), Kout).reshape(1, DKout)

    # Generation-aware VMEM budgets + padding-aware block-row selection.
    vmem_limit, budget = _vmem_budget()
    if vmem_budget_bytes is not None:
        budget = vmem_budget_bytes
    x_item = jnp.dtype(x.dtype).itemsize
    out_item = jnp.dtype(out_dtype).itemsize
    sw_item = jnp.dtype(op_dtype).itemsize
    const_bytes = 2 * (D * _ceil_to(K, 8) * _ceil_to(C, 128) * sw_item
                       + 8 * _ceil_to(DKout, 128) * 4)
    if block_rows is None:
        TL = _choose_block_rows(B, L, D, K, C, Kout, x_item, out_item,
                                const_bytes, budget)
    else:
        TL = block_rows
    assert L % TL == 0 and (TL == L or TL % 8 == 0), (L, TL)

    grid = (B, L // TL)
    kernel = partial(_down_sample_kernel, expanded=expanded)

    out = pl.pallas_call(
        kernel,
        out_shape=jax.ShapeDtypeStruct((B, L, DKout), out_dtype),
        grid_spec=pltpu.PrefetchScalarGridSpec(
            num_scalar_prefetch=0,
            grid=grid,
            in_specs=[
                # x read in its native [B, D, L, K] layout, TL rows per step.
                pl.BlockSpec((1, D, TL, K), lambda b, lt: (b, 0, lt, 0)),
                # Constants: same block every step -> stay resident in VMEM.
                pl.BlockSpec((D, K, C), lambda b, lt: (0, 0, 0)),
                pl.BlockSpec((1, DKout), lambda b, lt: (0, 0)),
            ],
            out_specs=pl.BlockSpec((1, TL, DKout), lambda b, lt: (b, lt, 0)),
        ),
        compiler_params=pltpu.CompilerParams(
            dimension_semantics=("parallel", "parallel"),
            vmem_limit_bytes=vmem_limit,
        ),
    )(x, sw, b_row)

    # [B, L, D*Kout] -> [B*L, D, Kout] is a contiguous (free) reshape.
    return out.reshape(B * L, D, Kout), pad_value


if __name__ == "__main__":
    def reference(x, weight, bias, k):
        B, D, L, K = x.shape
        Kout = K // k
        x2 = jnp.transpose(x, (0, 2, 1, 3)).reshape(B * L, D, K)[:, :, :Kout * k]
        return jnp.sum(
            x2.reshape(B * L, D, Kout, k)
            * weight.reshape(D, k)[None, :, None, :], axis=-1,
        ) + bias[None, :, None]

    # Case 1: K divisible by kernel_size (pad_value == 0).
    B, D, L, K, ksz = 2, 8, 4, 16, 4
    kx, kw, kb = jax.random.split(jax.random.PRNGKey(0), 3)
    x = jax.random.normal(kx, (B, D, L, K), dtype=jnp.float32)
    weight = 0.1 * jax.random.normal(kw, (D, 1, ksz), dtype=jnp.float32)
    bias = 0.1 * jax.random.normal(kb, (D,), dtype=jnp.float32)
    out, pad = down_sample(x, weight, bias, ksz)
    out = jax.block_until_ready(out)
    ref = reference(x, weight, bias, ksz)
    assert out.shape == (B * L, D, K // ksz), out.shape
    assert pad == K % ksz
    assert jnp.allclose(out, ref, atol=1e-5, rtol=1e-5), \
        float(jnp.max(jnp.abs(out - ref)))

    # Case 2: K not divisible (tail dropped, pad_value == 2); B == 1 exercises
    # the >=2-step grid rule and a multiple-of-8 TL.
    B, D, L, K, ksz = 1, 8, 16, 18, 4
    kx, kw, kb = jax.random.split(jax.random.PRNGKey(1), 3)
    x = jax.random.normal(kx, (B, D, L, K), dtype=jnp.float32)
    weight = 0.1 * jax.random.normal(kw, (D, 1, ksz), dtype=jnp.float32)
    bias = 0.1 * jax.random.normal(kb, (D,), dtype=jnp.float32)
    out, pad = down_sample(x, weight, bias, ksz)
    out = jax.block_until_ready(out)
    ref = reference(x, weight, bias, ksz)
    assert out.shape == (B * L, D, K // ksz), out.shape
    assert pad == K % ksz == 2
    assert jnp.allclose(out, ref, atol=1e-5, rtol=1e-5), \
        float(jnp.max(jnp.abs(out - ref)))

    print("KERNEL_OK")
</pallas_src>

<mosaic_0001>
module attributes {stable_mosaic.version = 11 : i64} {
  func.func @_down_sample_kernel(%arg0: i32, %arg1: i32, %arg2: memref<1x8x4x16xf32, #tpu.memory_space<vmem>>, %arg3: memref<8x16x32xf32, #tpu.memory_space<vmem>>, %arg4: memref<1x32xf32, #tpu.memory_space<vmem>>, %arg5: memref<1x4x32xf32, #tpu.memory_space<vmem>>) attributes {dimension_semantics = [#tpu.dimension_semantics<parallel>, #tpu.dimension_semantics<parallel>], iteration_bounds = array<i64: 2, 1>, scalar_prefetch = 0 : i64, scratch_operands = 0 : i64, tpu.core_type = #tpu.core_type<tc>, window_params = [{transform_indices = @transform_0, window_bounds = array<i64: 1, 8, 4, 16>}, {pipeline_mode = #tpu.pipeline_mode<synchronous>, transform_indices = @transform_1, window_bounds = array<i64: 8, 16, 32>}, {pipeline_mode = #tpu.pipeline_mode<synchronous>, transform_indices = @transform_2, window_bounds = array<i64: 1, 32>}, {transform_indices = @transform_3, window_bounds = array<i64: 1, 4, 32>}]} {
    %c0 = arith.constant 0 : index
    %c0_0 = arith.constant 0 : index
    %c0_1 = arith.constant 0 : index
    %c0_2 = arith.constant 0 : index
    %0 = vector.load %arg2[%c0, %c0_0, %c0_1, %c0_2] : memref<1x8x4x16xf32, #tpu.memory_space<vmem>>, vector<1x8x4x16xf32>
    %1 = vector.shape_cast %0 : vector<1x8x4x16xf32> to vector<8x4x16xf32>
    %c0_3 = arith.constant 0 : index
    %c0_4 = arith.constant 0 : index
    %c0_5 = arith.constant 0 : index
    %2 = vector.load %arg3[%c0_3, %c0_4, %c0_5] : memref<8x16x32xf32, #tpu.memory_space<vmem>>, vector<8x16x32xf32>
    "tpu.trace_start"() <{level = 10 : i32, message = "dtk,dkc->dtc"}> : () -> ()
    %cst = arith.constant dense<0.000000e+00> : vector<8x4x32xf32>
    %3 = tpu.matmul %1, %2, %cst {dimension_numbers = #tpu.dot_dimension_numbers<[2], [1], [1], [2], [0, 0, 0, 1, 1, 2], [0], [0]>} : vector<8x4x16xf32>, vector<8x16x32xf32>, vector<8x4x32xf32> -> vector<8x4x32xf32>
    "tpu.trace_stop"() : () -> ()
    %cst_6 = arith.constant dense<0.000000e+00> : vector<4x32xf32>
    %4 = vector.multi_reduction <add>, %3, %cst_6 [0] : vector<8x4x32xf32> to vector<4x32xf32>
    %c0_7 = arith.constant 0 : index
    %c0_8 = arith.constant 0 : index
    %5 = vector.load %arg4[%c0_7, %c0_8] : memref<1x32xf32, #tpu.memory_space<vmem>>, vector<1x32xf32>
    %6 = vector.broadcast %5 : vector<1x32xf32> to vector<4x32xf32>
    %7 = arith.addf %4, %6 : vector<4x32xf32>
    %c0_9 = arith.constant 0 : index
    %c0_10 = arith.constant 0 : index
    %c0_11 = arith.constant 0 : index
    %8 = vector.load %arg5[%c0_9, %c0_10, %c0_11] : memref<1x4x32xf32, #tpu.memory_space<vmem>>, vector<1x4x32xf32>
    %9 = vector.shape_cast %8 : vector<1x4x32xf32> to vector<4x32xf32>
    %10 = vector.shape_cast %7 : vector<4x32xf32> to vector<1x4x32xf32>
    tpu.vector_store %arg5[%c0_9, %c0_10, %c0_11], %10 {strides = array<i32>} : memref<1x4x32xf32, #tpu.memory_space<vmem>>, vector<1x4x32xf32>,
    return
  }
  func.func @transform_0(%arg0: i32, %arg1: i32) -> (i32, i32, i32, i32) {
    %c0_i32 = arith.constant 0 : i32
    %c0_i32_0 = arith.constant 0 : i32
    %c0_i32_1 = arith.constant 0 : i32
    return %arg0, %c0_i32, %arg1, %c0_i32_0 : i32, i32, i32, i32
  }
  func.func @transform_1(%arg0: i32, %arg1: i32) -> (i32, i32, i32) {
    %c0_i32 = arith.constant 0 : i32
    %c0_i32_0 = arith.constant 0 : i32
    %c0_i32_1 = arith.constant 0 : i32
    %c0_i32_2 = arith.constant 0 : i32
    return %c0_i32, %c0_i32_0, %c0_i32_1 : i32, i32, i32
  }
  func.func @transform_2(%arg0: i32, %arg1: i32) -> (i32, i32) {
    %c0_i32 = arith.constant 0 : i32
    %c0_i32_0 = arith.constant 0 : i32
    %c0_i32_1 = arith.constant 0 : i32
    return %c0_i32, %c0_i32_0 : i32, i32
  }
  func.func @transform_3(%arg0: i32, %arg1: i32) -> (i32, i32, i32) {
    %c0_i32 = arith.constant 0 : i32
    %c0_i32_0 = arith.constant 0 : i32
    return %arg0, %arg1, %c0_i32 : i32, i32, i32
  }
}

</mosaic_0001>

<llo_original>
// kernel: tpu_custom_call.1
$region0: #{tpu_custom_call.1}
  #allocation0 [shape = 'u32[]', space=smem, size = 0x4, offset = 0x4, fixed_abs, tag = 'smem constant byte address 0x4 - core index']
  #allocation1 [shape = 'u32[144,128]{1,0:T(1,128)}', space=vmem, size = 0x12000, scoped, tag = 'internal scratch']
  %s0 = inlined_call_operand.hbm [shape: f32[2,8,4,16], index: 0, kind: input, shape index: {}]
  %s1 = inlined_call_operand.hbm [shape: f32[8,16,32], index: 1, kind: input, shape index: {}]
  %s2 = inlined_call_operand.vmem [shape: f32[1,32], index: 2, kind: input, shape index: {}]
  %s3 = inlined_call_operand.hbm [shape: f32[2,4,32], index: 3, kind: output, shape index: {}]
  %s4 = sld [smem:[#allocation0]]
  $region53: #{tpu_custom_call.1} parent=0
    _
  %s6 = ssub.s32 1, %s4
  %s7 = scalar_select 0, %s6, %s4
  $region1: #{tpu_custom_call.1} parent=0
    #allocation2 [shape = 'u8[32768]{0}', space=vmem, size = 0x8000, scoped, tag = 'input window, operand 0']
    #allocation3 [shape = 's32[2]{0}', space=sflag, size = 0x8, scoped, tag = 'scoped memory for tpu_custom_call.1']
    #allocation4 [shape = 's32[2]{0}', space=sflag, size = 0x8, scoped, tag = 'scoped memory for tpu_custom_call.1']
    #allocation5 [shape = 'u8[65536]{0}', space=vmem, size = 0x10000, scoped, tag = 'input window, operand 1, single buffered']
    #allocation6 [shape = 's32[1]{0}', space=sflag, size = 0x4, scoped, tag = 'scoped memory for tpu_custom_call.1']
    #allocation7 [shape = 'u8[4096]{0}', space=vmem, size = 0x1000, scoped, tag = 'output window, operand 0']
    %8 = vsyncpa [#allocation3], 0
    %s9 = scalar_lea.sflag [#allocation3], 1
    %10 = vsyncpa %s9, 0
    %11 = vsyncpa [#allocation6], 0
    %12 = vsyncpa [#allocation4], 0
    %s13 = scalar_lea.sflag [#allocation4], 1
    %14 = vsyncpa %s13, 0
    loop: start=0, step=1, limit=4
    $region2: #{tpu_custom_call.1} parent=1 // loop_pre_header
      _
    $region3: #{tpu_custom_call.1} parent=1 // loop_header
      %s16 = sphi 0, %s20
      %p17 = scmp.ge.s32.totalorder %s16, 4
      %s23 = sphi 0, %s35
      %s24 = sphi 0, %s31
      %s25 = sphi 0, %s23
      %s26 = sphi 0, %s24
      %s27 = sphi 0, %s25
      %s28 = sphi 0, %s26
      %s40 = sphi 0, %s42
      %s43 = sphi 0, %s40
      %s44 = sphi 0, %s43
      %s60 = sphi 0, %s44
      %s64 = sphi 0, %s64
      %s66 = sphi 0, %s64
      %s67 = sphi 0, %s66
      %s81 = sphi 0, %s67
      %s85 = sphi 0, %s85
      %s87 = sphi 0, %s85
      %s88 = sphi 0, %s87
      %s102 = sphi 0, %s88
      %s110 = sphi 0, %s112
      %s113 = sphi 0, %s110
      %s114 = sphi 0, %s113
      %s130 = sphi 0, %s114
    $region4: #{tpu_custom_call.1} parent=1 // loop_header_branch
      %19 = sbr.rel (%p17) target = $region8
    $region5: #{tpu_custom_call.1} parent=1 // loop_body
      %s21 = ssub.s32 %s16, 1
      %s22 = ssub.s32 %s16, 2
      %s29 = sadd.s32 1, %s24
      %p30 = scmp.ge.s32.totalorder %s29, 1
      %s31 = scalar_select %p30, 0, %s29
      %s32 = sadd.s32 1, %s23
      %s33 = scalar_select %p30, %s32, %s23
      %p34 = scmp.ge.s32.totalorder %s33, 2
      %s35 = scalar_select %p34, 0, %s33
      %s36 = ssub.s32 %s23, %s35
      %s37 = ssub.s32 %s24, %s31
      %s38 = sor.u32 %s36, %s37
      %p39 = scmp.eq.s32.totalorder %s38, 0
      %s41 = sadd.s32 %s40, 1
      %s42 = scalar_select %p39, %s40, %s41
      %p45 = pneg %p39
      %p46 = scmp.eq.s32.totalorder %s16, 1
      %p47 = por %p45, %p46
      %p48 = scmp.ne.s32.totalorder %s40, %s43
      %p49 = scmp.eq.s32.totalorder %s16, 0
      %p50 = por %p48, %p49
      %p51 = scmp.ne.s32.totalorder %s40, %s43
      %p52 = scmp.eq.s32.totalorder %s21, 1
      %p53 = por %p51, %p52
      %p54 = scmp.ne.s32.totalorder %s43, %s44
      %p55 = scmp.eq.s32.totalorder %s21, 0
      %p56 = por %p54, %p55
      %p57 = scmp.ne.s32.totalorder %s43, %s44
      %p58 = scmp.eq.s32.totalorder %s22, 1
      %p59 = por %p57, %p58
      %p61 = scmp.ne.s32.totalorder %s44, %s60
      %p62 = scmp.eq.s32.totalorder %s22, 0
      %p63 = por %p61, %p62
      %s65 = sadd.s32 %s64, 1
      %p68 = scmp.eq.s32.totalorder %s16, 1
      %p69 = scmp.ne.s32.totalorder %s64, %s66
      %p70 = scmp.eq.s32.totalorder %s16, 0
      %p71 = por %p69, %p70
      %p72 = scmp.ne.s32.totalorder %s64, %s66
      %p73 = scmp.eq.s32.totalorder %s21, 1
      %p74 = por %p72, %p73
      %p75 = scmp.ne.s32.totalorder %s66, %s67
      %p76 = scmp.eq.s32.totalorder %s21, 0
      %p77 = por %p75, %p76
      %p78 = scmp.ne.s32.totalorder %s66, %s67
      %p79 = scmp.eq.s32.totalorder %s22, 1
      %p80 = por %p78, %p79
      %p82 = scmp.ne.s32.totalorder %s67, %s81
      %p83 = scmp.eq.s32.totalorder %s22, 0
      %p84 = por %p82, %p83
      %s86 = sadd.s32 %s85, 1
      %p89 = scmp.eq.s32.totalorder %s16, 1
      %p90 = scmp.ne.s32.totalorder %s85, %s87
      %p91 = scmp.eq.s32.totalorder %s16, 0
      %p92 = por %p90, %p91
      %p93 = scmp.ne.s32.totalorder %s85, %s87
      %p94 = scmp.eq.s32.totalorder %s21, 1
      %p95 = por %p93, %p94
      %p96 = scmp.ne.s32.totalorder %s87, %s88
      %p97 = scmp.eq.s32.totalorder %s21, 0
      %p98 = por %p96, %p97
      %p99 = scmp.ne.s32.totalorder %s87, %s88
      %p100 = scmp.eq.s32.totalorder %s22, 1
      %p101 = por %p99, %p100
      %p103 = scmp.ne.s32.totalorder %s88, %s102
      %p104 = scmp.eq.s32.totalorder %s22, 0
      %p105 = por %p103, %p104
      %s106 = ssub.s32 %s23, %s35
      %s107 = ssub.s32 %s24, %s31
      %s108 = sor.u32 %s106, %s107
      %p109 = scmp.eq.s32.totalorder %s108, 0
      %s111 = sadd.s32 %s110, 1
      %s112 = scalar_select %p109, %s110, %s111
      %p115 = pneg %p109
      %p116 = scmp.eq.s32.totalorder %s16, 1
      %p117 = por %p115, %p116
      %p118 = scmp.ne.s32.totalorder %s110, %s113
      %p119 = scmp.eq.s32.totalorder %s16, 0
      %p120 = por %p118, %p119
      %p121 = scmp.ne.s32.totalorder %s110, %s113
      %p122 = scmp.eq.s32.totalorder %s21, 1
      %p123 = por %p121, %p122
      %p124 = scmp.ne.s32.totalorder %s113, %s114
      %p125 = scmp.eq.s32.totalorder %s21, 0
      %p126 = por %p124, %p125
      %p127 = scmp.ne.s32.totalorder %s113, %s114
      %p128 = scmp.eq.s32.totalorder %s22, 1
      %p129 = por %p127, %p128
      %p131 = scmp.ne.s32.totalorder %s114, %s130
      %p132 = scmp.eq.s32.totalorder %s22, 0
      %p133 = por %p131, %p132
      %p134 = scmp.le.s32.totalorder 1, %s16
      %p135 = scmp.lt.s32.totalorder %s16, 3
      %p136 = pnand %p134, %p135
      %p137 = pneg %p136
      // Predicated region
      $region9: #{tpu_custom_call.1} parent=5 // pred_check
        _
      $region10: #{tpu_custom_call.1} parent=5 // pred_check_branch
        %139 = sbr.rel (%p136) target = $region12
      $region11: #{tpu_custom_call.1} parent=5 // pred_region
        %s140 = ssub.s32 %s16, 1
        // Predicated region
        $region13: #{tpu_custom_call.1} parent=11 // pred_check
          %p141 = pneg %p77
        $region14: #{tpu_custom_call.1} parent=11 // pred_check_branch
          %143 = sbr.rel (%p141) target = $region16
        $region15: #{tpu_custom_call.1} parent=11 // pred_region
          %s145 = ssub.s32 2048, 2048
          %146 = vsyncadd [#allocation6], %s145
          %s147 = sshll.u32 [#allocation5], 4
          %s148 = int_to_ptr.vmem [resolvable:$true] %s147
          %153 = dma.hbm_to_vmem [thread:$0]  %s1, 2048, %s148, [#allocation6], 128, 128, 8
        $region16: #{tpu_custom_call.1} parent=11 // pred_fallthru
          _
        // Predicated region
        $region17: #{tpu_custom_call.1} parent=11 // pred_check
          %p154 = pneg %p98
        $region18: #{tpu_custom_call.1} parent=11 // pred_check_branch
          %156 = sbr.rel (%p154) target = $region20
        $region19: #{tpu_custom_call.1} parent=11 // pred_region
          _
        $region20: #{tpu_custom_call.1} parent=11 // pred_fallthru
          _
      $region12: #{tpu_custom_call.1} parent=5 // pred_fallthru
        _
      %p157 = scmp.lt.s32.totalorder %s16, 2
      // Predicated region
      $region21: #{tpu_custom_call.1} parent=5 // pred_check
        %p158 = pneg %p157
      $region22: #{tpu_custom_call.1} parent=5 // pred_check_branch
        %160 = sbr.rel (%p158) target = $region24
      $region23: #{tpu_custom_call.1} parent=5 // pred_region
        // Predicated region
        $region25: #{tpu_custom_call.1} parent=23 // pred_check
          %p161 = pneg %p50
        $region26: #{tpu_custom_call.1} parent=23 // pred_check_branch
          %163 = sbr.rel (%p161) target = $region28
        $region27: #{tpu_custom_call.1} parent=23 // pred_region
          %s164 = sand.u32 %s40, 1
          %s165 = scalar_lea.sflag [#allocation3], %s164
          %s166 = sand.u32 %s40, 1
          %s167 = smul.addr %s166, 32
          %s168 = scalar_lea.vmem [#allocation2], %s167
          %s170 = ssub.s32 512, 512
          %171 = vsyncadd %s165, %s170
          %s172 = smul.addr %s23, 8
          %s173 = sadd.s32 %s24, %s172
          %s174 = smul.addr %s173, 64
          %s175 = scalar_lea.hbm %s0, %s174
          %s176 = sshll.u32 %s168, 4
          %s177 = int_to_ptr.vmem [resolvable:$true] %s176
          %182 = dma.hbm_to_vmem [thread:$0]  %s175, 512, %s177, %s165, 64, 64, 4
        $region28: #{tpu_custom_call.1} parent=23 // pred_fallthru
          _
      $region24: #{tpu_custom_call.1} parent=5 // pred_fallthru
        _
      %p183 = scmp.le.s32.totalorder 1, %s16
      %p184 = scmp.lt.s32.totalorder %s16, 3
      %p185 = pnand %p183, %p184
      %p186 = pneg %p185
      // Predicated region
      $region29: #{tpu_custom_call.1} parent=5 // pred_check
        _
      $region30: #{tpu_custom_call.1} parent=5 // pred_check_branch
        %188 = sbr.rel (%p185) target = $region32
      $region31: #{tpu_custom_call.1} parent=5 // pred_region
        %s189 = ssub.s32 %s16, 1
        %s190 = sand.u32 %s43, 1
        %s191 = scalar_lea.sflag [#allocation3], %s190
        %s192 = sand.u32 %s43, 1
        %s193 = smul.addr %s192, 32
        %s194 = scalar_lea.vmem [#allocation2], %s193
        // Predicated region
        $region33: #{tpu_custom_call.1} parent=31 // pred_check
          %p195 = pneg %p56
        $region34: #{tpu_custom_call.1} parent=31 // pred_check_branch
          %197 = sbr.rel (%p195) target = $region36
        $region35: #{tpu_custom_call.1} parent=31 // pred_region
          %198 = dma.done %s191, 512
        $region36: #{tpu_custom_call.1} parent=31 // pred_fallthru
          _
        // Predicated region
        $region37: #{tpu_custom_call.1} parent=31 // pred_check
          %p199 = pneg %p77
        $region38: #{tpu_custom_call.1} parent=31 // pred_check_branch
          %201 = sbr.rel (%p199) target = $region40
        $region39: #{tpu_custom_call.1} parent=31 // pred_region
          %202 = dma.done [#allocation6], 2048
        $region40: #{tpu_custom_call.1} parent=31 // pred_fallthru
          _
        %s203 = sand.u32 %s43, 1
        %s204 = scalar_lea.sflag [#allocation3], %s203
        %s205 = sand.u32 %s43, 1
        %s206 = smul.addr %s205, 32
        %s207 = scalar_lea.vmem [#allocation2], %s206
        %p208 = pneg %p56
        %p209 = pneg %p53
        %p210 = pneg %p77
        %p211 = pneg %p74
        %p212 = pneg %p98
        %p213 = pneg %p95
        %p214 = pneg %p126
        %p215 = pneg %p123
        %s216 = sand.u32 %s113, 1
        %s217 = scalar_lea.sflag [#allocation4], %s216
        %s218 = sand.u32 %s113, 1
        %s219 = smul.addr %s218, 4
        %s220 = scalar_lea.vmem [#allocation7], %s219
        %v221 = vld [vmem:[%s194] sm:$0xf]
        %v222 = vld [vmem:[%s194 + $0x4] sm:$0xf]
        %v223 = vld [vmem:[%s194 + $0x8] sm:$0xf]
        %v224 = vld [vmem:[%s194 + $0xc] sm:$0xf]
        %v225 = vld [vmem:[%s194 + $0x10] sm:$0xf]
        %v226 = vld [vmem:[%s194 + $0x14] sm:$0xf]
        %v227 = vld [vmem:[%s194 + $0x18] sm:$0xf]
        %v228 = vld [vmem:[%s194 + $0x1c] sm:$0xf]
        %v229 = vld [vmem:[#allocation5] sm:$0xff]
        %v230 = vld [vmem:[#allocation5 + $0x8] sm:$0xff]
        %v231 = vld [vmem:[#allocation5 + $0x10] sm:$0xff]
        %v232 = vld [vmem:[#allocation5 + $0x18] sm:$0xff]
        %v233 = vld [vmem:[#allocation5 + $0x20] sm:$0xff]
        %v234 = vld [vmem:[#allocation5 + $0x28] sm:$0xff]
        %v235 = vld [vmem:[#allocation5 + $0x30] sm:$0xff]
        %v236 = vld [vmem:[#allocation5 + $0x38] sm:$0xff]
        %v237 = vld [vmem:[#allocation5 + $0x40] sm:$0xff]
        %v238 = vld [vmem:[#allocation5 + $0x48] sm:$0xff]
        %v239 = vld [vmem:[#allocation5 + $0x50] sm:$0xff]
        %v240 = vld [vmem:[#allocation5 + $0x58] sm:$0xff]
        %v241 = vld [vmem:[#allocation5 + $0x60] sm:$0xff]
        %v242 = vld [vmem:[#allocation5 + $0x68] sm:$0xff]
        %v243 = vld [vmem:[#allocation5 + $0x70] sm:$0xff]
        %v244 = vld [vmem:[#allocation5 + $0x78] sm:$0xff]
        %vm245 = vcmask 130048
        %v247 = vsel %vm245, %v221, 0
        %249 = vmatprep.subr.mxu0 0.0
        %250 = vmatpush1.msra.mxu0 0.0
        %251 = vmatprep.subr.mxu0 0.0
        %252 = vmatpush1.msra.mxu0 0.0
        %253 = vmatprep.subr.mxu0 0.0
        %254 = vmatpush1.msra.mxu0 0.0
        %255 = vmatprep.subr.mxu0 0.0
        %256 = vmatpush1.msra.mxu0 0.0
        %257 = vmatprep.subr.mxu0 0.0
        %258 = vmatpush1.msra.mxu0 0.0
        %259 = vmatprep.subr.mxu0 0.0
        %260 = vmatpush1.msra.mxu0 0.0
        %261 = vmatprep.subr.mxu0 0.0
        %262 = vmatpush1.msra.mxu0 0.0
        %263 = vmatprep.subr.mxu0 0.0
        %264 = vmatpush1.msra.mxu0 0.0
        %265 = vmatprep.subr.mxu0 0.0
        %266 = vmatpush1.msra.mxu0 0.0
        %267 = vmatprep.subr.mxu0 0.0
        %268 = vmatpush1.msra.mxu0 0.0
        %269 = vmatprep.subr.mxu0 0.0
        %270 = vmatpush1.msra.mxu0 0.0
        %271 = vmatprep.subr.mxu0 0.0
        %272 = vmatpush1.msra.mxu0 0.0
        %273 = vmatprep.subr.mxu0 0.0
        %274 = vmatpush1.msra.mxu0 0.0
        %275 = vmatprep.subr.mxu0 0.0
        %276 = vmatpush1.msra.mxu0 0.0
        %277 = vmatprep.subr.mxu0 0.0
        %278 = vmatpush1.msra.mxu0 %v230
        %279 = vmatprep.subr.mxu0 0.0
        %280 = vmatpush1.msra.mxu0 %v229
        %281 = vmatprep.subr.mxu0 0.0
        %282 = vmatpush2.msra.mxu0 0.0
        %283 = vmatprep.subr.mxu0 0.0
        %284 = vmatpush2.msra.mxu0 0.0
        %285 = vmatprep.subr.mxu0 0.0
        %286 = vmatpush2.msra.mxu0 0.0
        %287 = vmatprep.subr.mxu0 0.0
        %288 = vmatpush2.msra.mxu0 0.0
        %289 = vmatprep.subr.mxu0 0.0
        %290 = vmatpush2.msra.mxu0 0.0
        %291 = vmatprep.subr.mxu0 0.0
        %292 = vmatpush2.msra.mxu0 0.0
        %293 = vmatprep.subr.mxu0 0.0
        %294 = vmatpush2.msra.mxu0 0.0
        %295 = vmatprep.subr.mxu0 0.0
        %296 = vmatpush2.msra.mxu0 0.0
        %297 = vmatprep.subr.mxu0 0.0
        %298 = vmatpush2.msra.mxu0 0.0
        %299 = vmatprep.subr.mxu0 0.0
        %300 = vmatpush2.msra.mxu0 0.0
        %301 = vmatprep.subr.mxu0 0.0
        %302 = vmatpush2.msra.mxu0 0.0
        %303 = vmatprep.subr.mxu0 0.0
        %304 = vmatpush2.msra.mxu0 0.0
        %305 = vmatprep.subr.mxu0 0.0
        %306 = vmatpush2.msra.mxu0 0.0
        %307 = vmatprep.subr.mxu0 0.0
        %308 = vmatpush2.msra.mxu0 0.0
        %309 = vmatprep.subr.mxu0 0.0
        %310 = vmatpush2.msra.mxu0 0.0
        %311 = vmatprep.subr.mxu0 0.0
        %312 = vmatpush2.msra.mxu0 0.0
        %313 = vmatprep.mubr.f32.mxu0 0.0
        %314 = vmatmul.mubr.f32.gmra.mxu0 %v247
        %v315 = vpop.f32.mrf.mxu0
        %v316 = vadd.f32 0.0, %v315
        %v317 = vpop.f32.mrf.mxu0
        %318 = vdwg.mxu0
        %v320 = vsel %vm245, %v222, 0
        %322 = vmatprep.subr.mxu0 0.0
        %323 = vmatpush1.msra.mxu0 0.0
        %324 = vmatprep.subr.mxu0 0.0
        %325 = vmatpush1.msra.mxu0 0.0
        %326 = vmatprep.subr.mxu0 0.0
        %327 = vmatpush1.msra.mxu0 0.0
        %328 = vmatprep.subr.mxu0 0.0
        %329 = vmatpush1.msra.mxu0 0.0
        %330 = vmatprep.subr.mxu0 0.0
        %331 = vmatpush1.msra.mxu0 0.0
        %332 = vmatprep.subr.mxu0 0.0
        %333 = vmatpush1.msra.mxu0 0.0
        %334 = vmatprep.subr.mxu0 0.0
        %335 = vmatpush1.msra.mxu0 0.0
        %336 = vmatprep.subr.mxu0 0.0
        %337 = vmatpush1.msra.mxu0 0.0
        %338 = vmatprep.subr.mxu0 0.0
        %339 = vmatpush1.msra.mxu0 0.0
        %340 = vmatprep.subr.mxu0 0.0
        %341 = vmatpush1.msra.mxu0 0.0
        %342 = vmatprep.subr.mxu0 0.0
        %343 = vmatpush1.msra.mxu0 0.0
        %344 = vmatprep.subr.mxu0 0.0
        %345 = vmatpush1.msra.mxu0 0.0
        %346 = vmatprep.subr.mxu0 0.0
        %347 = vmatpush1.msra.mxu0 0.0
        %348 = vmatprep.subr.mxu0 0.0
        %349 = vmatpush1.msra.mxu0 0.0
        %350 = vmatprep.subr.mxu0 0.0
        %351 = vmatpush1.msra.mxu0 %v232
        %352 = vmatprep.subr.mxu0 0.0
        %353 = vmatpush1.msra.mxu0 %v231
        %354 = vmatprep.subr.mxu0 0.0
        %355 = vmatpush2.msra.mxu0 0.0
        %356 = vmatprep.subr.mxu0 0.0
        %357 = vmatpush2.msra.mxu0 0.0
        %358 = vmatprep.subr.mxu0 0.0
        %359 = vmatpush2.msra.mxu0 0.0
        %360 = vmatprep.subr.mxu0 0.0
        %361 = vmatpush2.msra.mxu0 0.0
        %362 = vmatprep.subr.mxu0 0.0
        %363 = vmatpush2.msra.mxu0 0.0
        %364 = vmatprep.subr.mxu0 0.0
        %365 = vmatpush2.msra.mxu0 0.0
        %366 = vmatprep.subr.mxu0 0.0
        %367 = vmatpush2.msra.mxu0 0.0
        %368 = vmatprep.subr.mxu0 0.0
        %369 = vmatpush2.msra.mxu0 0.0
        %370 = vmatprep.subr.mxu0 0.0
        %371 = vmatpush2.msra.mxu0 0.0
        %372 = vmatprep.subr.mxu0 0.0
        %373 = vmatpush2.msra.mxu0 0.0
        %374 = vmatprep.subr.mxu0 0.0
        %375 = vmatpush2.msra.mxu0 0.0
        %376 = vmatprep.subr.mxu0 0.0
        %377 = vmatpush2.msra.mxu0 0.0
        %378 = vmatprep.subr.mxu0 0.0
        %379 = vmatpush2.msra.mxu0 0.0
        %380 = vmatprep.subr.mxu0 0.0
        %381 = vmatpush2.msra.mxu0 0.0
        %382 = vmatprep.subr.mxu0 0.0
        %383 = vmatpush2.msra.mxu0 0.0
        %384 = vmatprep.subr.mxu0 0.0
        %385 = vmatpush2.msra.mxu0 0.0
        %386 = vmatprep.mubr.f32.mxu0 0.0
        %387 = vmatmul.mubr.f32.gmra.mxu0 %v320
        %v388 = vpop.f32.mrf.mxu0
        %v389 = vadd.f32 0.0, %v388
        %v390 = vpop.f32.mrf.mxu0
        %391 = vdwg.mxu0
        %v393 = vsel %vm245, %v223, 0
        %395 = vmatprep.subr.mxu0 0.0
        %396 = vmatpush1.msra.mxu0 0.0
        %397 = vmatprep.subr.mxu0 0.0
        %398 = vmatpush1.msra.mxu0 0.0
        %399 = vmatprep.subr.mxu0 0.0
        %400 = vmatpush1.msra.mxu0 0.0
        %401 = vmatprep.subr.mxu0 0.0
        %402 = vmatpush1.msra.mxu0 0.0
        %403 = vmatprep.subr.mxu0 0.0
        %404 = vmatpush1.msra.mxu0 0.0
        %405 = vmatprep.subr.mxu0 0.0
        %406 = vmatpush1.msra.mxu0 0.0
        %407 = vmatprep.subr.mxu0 0.0
        %408 = vmatpush1.msra.mxu0 0.0
        %409 = vmatprep.subr.mxu0 0.0
        %410 = vmatpush1.msra.mxu0 0.0
        %411 = vmatprep.subr.mxu0 0.0
        %412 = vmatpush1.msra.mxu0 0.0
        %413 = vmatprep.subr.mxu0 0.0
        %414 = vmatpush1.msra.mxu0 0.0
        %415 = vmatprep.subr.mxu0 0.0
        %416 = vmatpush1.msra.mxu0 0.0
        %417 = vmatprep.subr.mxu0 0.0
        %418 = vmatpush1.msra.mxu0 0.0
        %419 = vmatprep.subr.mxu0 0.0
        %420 = vmatpush1.msra.mxu0 0.0
        %421 = vmatprep.subr.mxu0 0.0
        %422 = vmatpush1.msra.mxu0 0.0
        %423 = vmatprep.subr.mxu0 0.0
        %424 = vmatpush1.msra.mxu0 %v234
        %425 = vmatprep.subr.mxu0 0.0
        %426 = vmatpush1.msra.mxu0 %v233
        %427 = vmatprep.subr.mxu0 0.0
        %428 = vmatpush2.msra.mxu0 0.0
        %429 = vmatprep.subr.mxu0 0.0
        %430 = vmatpush2.msra.mxu0 0.0
        %431 = vmatprep.subr.mxu0 0.0
        %432 = vmatpush2.msra.mxu0 0.0
        %433 = vmatprep.subr.mxu0 0.0
        %434 = vmatpush2.msra.mxu0 0.0
        %435 = vmatprep.subr.mxu0 0.0
        %436 = vmatpush2.msra.mxu0 0.0
        %437 = vmatprep.subr.mxu0 0.0
        %438 = vmatpush2.msra.mxu0 0.0
        %439 = vmatprep.subr.mxu0 0.0
        %440 = vmatpush2.msra.mxu0 0.0
        %441 = vmatprep.subr.mxu0 0.0
        %442 = vmatpush2.msra.mxu0 0.0
        %443 = vmatprep.subr.mxu0 0.0
        %444 = vmatpush2.msra.mxu0 0.0
        %445 = vmatprep.subr.mxu0 0.0
        %446 = vmatpush2.msra.mxu0 0.0
        %447 = vmatprep.subr.mxu0 0.0
        %448 = vmatpush2.msra.mxu0 0.0
        %449 = vmatprep.subr.mxu0 0.0
        %450 = vmatpush2.msra.mxu0 0.0
        %451 = vmatprep.subr.mxu0 0.0
        %452 = vmatpush2.msra.mxu0 0.0
        %453 = vmatprep.subr.mxu0 0.0
        %454 = vmatpush2.msra.mxu0 0.0
        %455 = vmatprep.subr.mxu0 0.0
        %456 = vmatpush2.msra.mxu0 0.0
        %457 = vmatprep.subr.mxu0 0.0
        %458 = vmatpush2.msra.mxu0 0.0
        %459 = vmatprep.mubr.f32.mxu0 0.0
        %460 = vmatmul.mubr.f32.gmra.mxu0 %v393
        %v461 = vpop.f32.mrf.mxu0
        %v462 = vadd.f32 0.0, %v461
        %v463 = vpop.f32.mrf.mxu0
        %464 = vdwg.mxu0
        %v466 = vsel %vm245, %v224, 0
        %468 = vmatprep.subr.mxu0 0.0
        %469 = vmatpush1.msra.mxu0 0.0
        %470 = vmatprep.subr.mxu0 0.0
        %471 = vmatpush1.msra.mxu0 0.0
        %472 = vmatprep.subr.mxu0 0.0
        %473 = vmatpush1.msra.mxu0 0.0
        %474 = vmatprep.subr.mxu0 0.0
        %475 = vmatpush1.msra.mxu0 0.0
        %476 = vmatprep.subr.mxu0 0.0
        %477 = vmatpush1.msra.mxu0 0.0
        %478 = vmatprep.subr.mxu0 0.0
        %479 = vmatpush1.msra.mxu0 0.0
        %480 = vmatprep.subr.mxu0 0.0
        %481 = vmatpush1.msra.mxu0 0.0
        %482 = vmatprep.subr.mxu0 0.0
        %483 = vmatpush1.msra.mxu0 0.0
        %484 = vmatprep.subr.mxu0 0.0
        %485 = vmatpush1.msra.mxu0 0.0
        %486 = vmatprep.subr.mxu0 0.0
        %487 = vmatpush1.msra.mxu0 0.0
        %488 = vmatprep.subr.mxu0 0.0
        %489 = vmatpush1.msra.mxu0 0.0
        %490 = vmatprep.subr.mxu0 0.0
        %491 = vmatpush1.msra.mxu0 0.0
        %492 = vmatprep.subr.mxu0 0.0
        %493 = vmatpush1.msra.mxu0 0.0
        %494 = vmatprep.subr.mxu0 0.0
        %495 = vmatpush1.msra.mxu0 0.0
        %496 = vmatprep.subr.mxu0 0.0
        %497 = vmatpush1.msra.mxu0 %v236
        %498 = vmatprep.subr.mxu0 0.0
        %499 = vmatpush1.msra.mxu0 %v235
        %500 = vmatprep.subr.mxu0 0.0
        %501 = vmatpush2.msra.mxu0 0.0
        %502 = vmatprep.subr.mxu0 0.0
        %503 = vmatpush2.msra.mxu0 0.0
        %504 = vmatprep.subr.mxu0 0.0
        %505 = vmatpush2.msra.mxu0 0.0
        %506 = vmatprep.subr.mxu0 0.0
        %507 = vmatpush2.msra.mxu0 0.0
        %508 = vmatprep.subr.mxu0 0.0
        %509 = vmatpush2.msra.mxu0 0.0
        %510 = vmatprep.subr.mxu0 0.0
        %511 = vmatpush2.msra.mxu0 0.0
        %512 = vmatprep.subr.mxu0 0.0
        %513 = vmatpush2.msra.mxu0 0.0
        %514 = vmatprep.subr.mxu0 0.0
        %515 = vmatpush2.msra.mxu0 0.0
        %516 = vmatprep.subr.mxu0 0.0
        %517 = vmatpush2.msra.mxu0 0.0
        %518 = vmatprep.subr.mxu0 0.0
        %519 = vmatpush2.msra.mxu0 0.0
        %520 = vmatprep.subr.mxu0 0.0
        %521 = vmatpush2.msra.mxu0 0.0
        %522 = vmatprep.subr.mxu0 0.0
        %523 = vmatpush2.msra.mxu0 0.0
        %524 = vmatprep.subr.mxu0 0.0
        %525 = vmatpush2.msra.mxu0 0.0
        %526 = vmatprep.subr.mxu0 0.0
        %527 = vmatpush2.msra.mxu0 0.0
        %528 = vmatprep.subr.mxu0 0.0
        %529 = vmatpush2.msra.mxu0 0.0
        %530 = vmatprep.subr.mxu0 0.0
        %531 = vmatpush2.msra.mxu0 0.0
        %532 = vmatprep.mubr.f32.mxu0 0.0
        %533 = vmatmul.mubr.f32.gmra.mxu0 %v466
        %v534 = vpop.f32.mrf.mxu0
        %v535 = vadd.f32 0.0, %v534
        %v536 = vpop.f32.mrf.mxu0
        %537 = vdwg.mxu0
        %v539 = vsel %vm245, %v225, 0
        %541 = vmatprep.subr.mxu0 0.0
        %542 = vmatpush1.msra.mxu0 0.0
        %543 = vmatprep.subr.mxu0 0.0
        %544 = vmatpush1.msra.mxu0 0.0
        %545 = vmatprep.subr.mxu0 0.0
        %546 = vmatpush1.msra.mxu0 0.0
        %547 = vmatprep.subr.mxu0 0.0
        %548 = vmatpush1.msra.mxu0 0.0
        %549 = vmatprep.subr.mxu0 0.0
        %550 = vmatpush1.msra.mxu0 0.0
        %551 = vmatprep.subr.mxu0 0.0
        %552 = vmatpush1.msra.mxu0 0.0
        %553 = vmatprep.subr.mxu0 0.0
        %554 = vmatpush1.msra.mxu0 0.0
        %555 = vmatprep.subr.mxu0 0.0
        %556 = vmatpush1.msra.mxu0 0.0
        %557 = vmatprep.subr.mxu0 0.0
        %558 = vmatpush1.msra.mxu0 0.0
        %559 = vmatprep.subr.mxu0 0.0
        %560 = vmatpush1.msra.mxu0 0.0
        %561 = vmatprep.subr.mxu0 0.0
        %562 = vmatpush1.msra.mxu0 0.0
        %563 = vmatprep.subr.mxu0 0.0
        %564 = vmatpush1.msra.mxu0 0.0
        %565 = vmatprep.subr.mxu0 0.0
        %566 = vmatpush1.msra.mxu0 0.0
        %567 = vmatprep.subr.mxu0 0.0
        %568 = vmatpush1.msra.mxu0 0.0
        %569 = vmatprep.subr.mxu0 0.0
        %570 = vmatpush1.msra.mxu0 %v238
        %571 = vmatprep.subr.mxu0 0.0
        %572 = vmatpush1.msra.mxu0 %v237
        %573 = vmatprep.subr.mxu0 0.0
        %574 = vmatpush2.msra.mxu0 0.0
        %575 = vmatprep.subr.mxu0 0.0
        %576 = vmatpush2.msra.mxu0 0.0
        %577 = vmatprep.subr.mxu0 0.0
        %578 = vmatpush2.msra.mxu0 0.0
        %579 = vmatprep.subr.mxu0 0.0
        %580 = vmatpush2.msra.mxu0 0.0
        %581 = vmatprep.subr.mxu0 0.0
        %582 = vmatpush2.msra.mxu0 0.0
        %583 = vmatprep.subr.mxu0 0.0
        %584 = vmatpush2.msra.mxu0 0.0
        %585 = vmatprep.subr.mxu0 0.0
        %586 = vmatpush2.msra.mxu0 0.0
        %587 = vmatprep.subr.mxu0 0.0
        %588 = vmatpush2.msra.mxu0 0.0
        %589 = vmatprep.subr.mxu0 0.0
        %590 = vmatpush2.msra.mxu0 0.0
        %591 = vmatprep.subr.mxu0 0.0
        %592 = vmatpush2.msra.mxu0 0.0
        %593 = vmatprep.subr.mxu0 0.0
        %594 = vmatpush2.msra.mxu0 0.0
        %595 = vmatprep.subr.mxu0 0.0
        %596 = vmatpush2.msra.mxu0 0.0
        %597 = vmatprep.subr.mxu0 0.0
        %598 = vmatpush2.msra.mxu0 0.0
        %599 = vmatprep.subr.mxu0 0.0
        %600 = vmatpush2.msra.mxu0 0.0
        %601 = vmatprep.subr.mxu0 0.0
        %602 = vmatpush2.msra.mxu0 0.0
        %603 = vmatprep.subr.mxu0 0.0
        %604 = vmatpush2.msra.mxu0 0.0
        %605 = vmatprep.mubr.f32.mxu0 0.0
        %606 = vmatmul.mubr.f32.gmra.mxu0 %v539
        %v607 = vpop.f32.mrf.mxu0
        %v608 = vadd.f32 0.0, %v607
        %v609 = vpop.f32.mrf.mxu0
        %610 = vdwg.mxu0
        %v612 = vsel %vm245, %v226, 0
        %614 = vmatprep.subr.mxu0 0.0
        %615 = vmatpush1.msra.mxu0 0.0
        %616 = vmatprep.subr.mxu0 0.0
        %617 = vmatpush1.msra.mxu0 0.0
        %618 = vmatprep.subr.mxu0 0.0
        %619 = vmatpush1.msra.mxu0 0.0
        %620 = vmatprep.subr.mxu0 0.0
        %621 = vmatpush1.msra.mxu0 0.0
        %622 = vmatprep.subr.mxu0 0.0
        %623 = vmatpush1.msra.mxu0 0.0
        %624 = vmatprep.subr.mxu0 0.0
        %625 = vmatpush1.msra.mxu0 0.0
        %626 = vmatprep.subr.mxu0 0.0
        %627 = vmatpush1.msra.mxu0 0.0
        %628 = vmatprep.subr.mxu0 0.0
        %629 = vmatpush1.msra.mxu0 0.0
        %630 = vmatprep.subr.mxu0 0.0
        %631 = vmatpush1.msra.mxu0 0.0
        %632 = vmatprep.subr.mxu0 0.0
        %633 = vmatpush1.msra.mxu0 0.0
        %634 = vmatprep.subr.mxu0 0.0
        %635 = vmatpush1.msra.mxu0 0.0
        %636 = vmatprep.subr.mxu0 0.0
        %637 = vmatpush1.msra.mxu0 0.0
        %638 = vmatprep.subr.mxu0 0.0
        %639 = vmatpush1.msra.mxu0 0.0
        %640 = vmatprep.subr.mxu0 0.0
        %641 = vmatpush1.msra.mxu0 0.0
        %642 = vmatprep.subr.mxu0 0.0
        %643 = vmatpush1.msra.mxu0 %v240
        %644 = vmatprep.subr.mxu0 0.0
        %645 = vmatpush1.msra.mxu0 %v239
        %646 = vmatprep.subr.mxu0 0.0
        %647 = vmatpush2.msra.mxu0 0.0
        %648 = vmatprep.subr.mxu0 0.0
        %649 = vmatpush2.msra.mxu0 0.0
        %650 = vmatprep.subr.mxu0 0.0
        %651 = vmatpush2.msra.mxu0 0.0
        %652 = vmatprep.subr.mxu0 0.0
        %653 = vmatpush2.msra.mxu0 0.0
        %654 = vmatprep.subr.mxu0 0.0
        %655 = vmatpush2.msra.mxu0 0.0
        %656 = vmatprep.subr.mxu0 0.0
        %657 = vmatpush2.msra.mxu0 0.0
        %658 = vmatprep.subr.mxu0 0.0
        %659 = vmatpush2.msra.mxu0 0.0
        %660 = vmatprep.subr.mxu0 0.0
        %661 = vmatpush2.msra.mxu0 0.0
        %662 = vmatprep.subr.mxu0 0.0
        %663 = vmatpush2.msra.mxu0 0.0
        %664 = vmatprep.subr.mxu0 0.0
        %665 = vmatpush2.msra.mxu0 0.0
        %666 = vmatprep.subr.mxu0 0.0
        %667 = vmatpush2.msra.mxu0 0.0
        %668 = vmatprep.subr.mxu0 0.0
        %669 = vmatpush2.msra.mxu0 0.0
        %670 = vmatprep.subr.mxu0 0.0
        %671 = vmatpush2.msra.mxu0 0.0
        %672 = vmatprep.subr.mxu0 0.0
        %673 = vmatpush2.msra.mxu0 0.0
        %674 = vmatprep.subr.mxu0 0.0
        %675 = vmatpush2.msra.mxu0 0.0
        %676 = vmatprep.subr.mxu0 0.0
        %677 = vmatpush2.msra.mxu0 0.0
        %678 = vmatprep.mubr.f32.mxu0 0.0
        %679 = vmatmul.mubr.f32.gmra.mxu0 %v612
        %v680 = vpop.f32.mrf.mxu0
        %v681 = vadd.f32 0.0, %v680
        %v682 = vpop.f32.mrf.mxu0
        %683 = vdwg.mxu0
        %v685 = vsel %vm245, %v227, 0
        %687 = vmatprep.subr.mxu0 0.0
        %688 = vmatpush1.msra.mxu0 0.0
        %689 = vmatprep.subr.mxu0 0.0
        %690 = vmatpush1.msra.mxu0 0.0
        %691 = vmatprep.subr.mxu0 0.0
        %692 = vmatpush1.msra.mxu0 0.0
        %693 = vmatprep.subr.mxu0 0.0
        %694 = vmatpush1.msra.mxu0 0.0
        %695 = vmatprep.subr.mxu0 0.0
        %696 = vmatpush1.msra.mxu0 0.0
        %697 = vmatprep.subr.mxu0 0.0
        %698 = vmatpush1.msra.mxu0 0.0
        %699 = vmatprep.subr.mxu0 0.0
        %700 = vmatpush1.msra.mxu0 0.0
        %701 = vmatprep.subr.mxu0 0.0
        %702 = vmatpush1.msra.mxu0 0.0
        %703 = vmatprep.subr.mxu0 0.0
        %704 = vmatpush1.msra.mxu0 0.0
        %705 = vmatprep.subr.mxu0 0.0
        %706 = vmatpush1.msra.mxu0 0.0
        %707 = vmatprep.subr.mxu0 0.0
        %708 = vmatpush1.msra.mxu0 0.0
        %709 = vmatprep.subr.mxu0 0.0
        %710 = vmatpush1.msra.mxu0 0.0
        %711 = vmatprep.subr.mxu0 0.0
        %712 = vmatpush1.msra.mxu0 0.0
        %713 = vmatprep.subr.mxu0 0.0
        %714 = vmatpush1.msra.mxu0 0.0
        %715 = vmatprep.subr.mxu0 0.0
        %716 = vmatpush1.msra.mxu0 %v242
        %717 = vmatprep.subr.mxu0 0.0
        %718 = vmatpush1.msra.mxu0 %v241
        %719 = vmatprep.subr.mxu0 0.0
        %720 = vmatpush2.msra.mxu0 0.0
        %721 = vmatprep.subr.mxu0 0.0
        %722 = vmatpush2.msra.mxu0 0.0
        %723 = vmatprep.subr.mxu0 0.0
        %724 = vmatpush2.msra.mxu0 0.0
        %725 = vmatprep.subr.mxu0 0.0
        %726 = vmatpush2.msra.mxu0 0.0
        %727 = vmatprep.subr.mxu0 0.0
        %728 = vmatpush2.msra.mxu0 0.0
        %729 = vmatprep.subr.mxu0 0.0
        %730 = vmatpush2.msra.mxu0 0.0
        %731 = vmatprep.subr.mxu0 0.0
        %732 = vmatpush2.msra.mxu0 0.0
        %733 = vmatprep.subr.mxu0 0.0
        %734 = vmatpush2.msra.mxu0 0.0
        %735 = vmatprep.subr.mxu0 0.0
        %736 = vmatpush2.msra.mxu0 0.0
        %737 = vmatprep.subr.mxu0 0.0
        %738 = vmatpush2.msra.mxu0 0.0
        %739 = vmatprep.subr.mxu0 0.0
        %740 = vmatpush2.msra.mxu0 0.0
        %741 = vmatprep.subr.mxu0 0.0
        %742 = vmatpush2.msra.mxu0 0.0
        %743 = vmatprep.subr.mxu0 0.0
        %744 = vmatpush2.msra.mxu0 0.0
        %745 = vmatprep.subr.mxu0 0.0
        %746 = vmatpush2.msra.mxu0 0.0
        %747 = vmatprep.subr.mxu0 0.0
        %748 = vmatpush2.msra.mxu0 0.0
        %749 = vmatprep.subr.mxu0 0.0
        %750 = vmatpush2.msra.mxu0 0.0
        %751 = vmatprep.mubr.f32.mxu0 0.0
        %752 = vmatmul.mubr.f32.gmra.mxu0 %v685
        %v753 = vpop.f32.mrf.mxu0
        %v754 = vadd.f32 0.0, %v753
        %v755 = vpop.f32.mrf.mxu0
        %756 = vdwg.mxu0
        %v758 = vsel %vm245, %v228, 0
        %760 = vmatprep.subr.mxu0 0.0
        %761 = vmatpush1.msra.mxu0 0.0
        %762 = vmatprep.subr.mxu0 0.0
        %763 = vmatpush1.msra.mxu0 0.0
        %764 = vmatprep.subr.mxu0 0.0
        %765 = vmatpush1.msra.mxu0 0.0
        %766 = vmatprep.subr.mxu0 0.0
        %767 = vmatpush1.msra.mxu0 0.0
        %768 = vmatprep.subr.mxu0 0.0
        %769 = vmatpush1.msra.mxu0 0.0
        %770 = vmatprep.subr.mxu0 0.0
        %771 = vmatpush1.msra.mxu0 0.0
        %772 = vmatprep.subr.mxu0 0.0
        %773 = vmatpush1.msra.mxu0 0.0
        %774 = vmatprep.subr.mxu0 0.0
        %775 = vmatpush1.msra.mxu0 0.0
        %776 = vmatprep.subr.mxu0 0.0
        %777 = vmatpush1.msra.mxu0 0.0
        %778 = vmatprep.subr.mxu0 0.0
        %779 = vmatpush1.msra.mxu0 0.0
        %780 = vmatprep.subr.mxu0 0.0
        %781 = vmatpush1.msra.mxu0 0.0
        %782 = vmatprep.subr.mxu0 0.0
        %783 = vmatpush1.msra.mxu0 0.0
        %784 = vmatprep.subr.mxu0 0.0
        %785 = vmatpush1.msra.mxu0 0.0
        %786 = vmatprep.subr.mxu0 0.0
        %787 = vmatpush1.msra.mxu0 0.0
        %788 = vmatprep.subr.mxu0 0.0
        %789 = vmatpush1.msra.mxu0 %v244
        %790 = vmatprep.subr.mxu0 0.0
        %791 = vmatpush1.msra.mxu0 %v243
        %792 = vmatprep.subr.mxu0 0.0
        %793 = vmatpush2.msra.mxu0 0.0
        %794 = vmatprep.subr.mxu0 0.0
        %795 = vmatpush2.msra.mxu0 0.0
        %796 = vmatprep.subr.mxu0 0.0
        %797 = vmatpush2.msra.mxu0 0.0
        %798 = vmatprep.subr.mxu0 0.0
        %799 = vmatpush2.msra.mxu0 0.0
        %800 = vmatprep.subr.mxu0 0.0
        %801 = vmatpush2.msra.mxu0 0.0
        %802 = vmatprep.subr.mxu0 0.0
        %803 = vmatpush2.msra.mxu0 0.0
        %804 = vmatprep.subr.mxu0 0.0
        %805 = vmatpush2.msra.mxu0 0.0
        %806 = vmatprep.subr.mxu0 0.0
        %807 = vmatpush2.msra.mxu0 0.0
        %808 = vmatprep.subr.mxu0 0.0
        %809 = vmatpush2.msra.mxu0 0.0
        %810 = vmatprep.subr.mxu0 0.0
        %811 = vmatpush2.msra.mxu0 0.0
        %812 = vmatprep.subr.mxu0 0.0
        %813 = vmatpush2.msra.mxu0 0.0
        %814 = vmatprep.subr.mxu0 0.0
        %815 = vmatpush2.msra.mxu0 0.0
        %816 = vmatprep.subr.mxu0 0.0
        %817 = vmatpush2.msra.mxu0 0.0
        %818 = vmatprep.subr.mxu0 0.0
        %819 = vmatpush2.msra.mxu0 0.0
        %820 = vmatprep.subr.mxu0 0.0
        %821 = vmatpush2.msra.mxu0 0.0
        %822 = vmatprep.subr.mxu0 0.0
        %823 = vmatpush2.msra.mxu0 0.0
        %824 = vmatprep.mubr.f32.mxu0 0.0
        %825 = vmatmul.mubr.f32.gmra.mxu0 %v758
        %v826 = vpop.f32.mrf.mxu0
        %v827 = vadd.f32 0.0, %v826
        %v828 = vpop.f32.mrf.mxu0
        %829 = vdwg.mxu0
        %vm830 = vcmask 257024
        %v831 = vsel %vm830, %v316, 0.0
        %v832 = vsel %vm830, %v389, 0.0
        %v833 = vadd.f32 %v831, %v832
        %v834 = vsel %vm830, %v462, 0.0
        %v835 = vadd.f32 %v833, %v834
        %v836 = vsel %vm830, %v535, 0.0
        %v837 = vadd.f32 %v835, %v836
        %v838 = vsel %vm830, %v608, 0.0
        %v839 = vadd.f32 %v837, %v838
        %v840 = vsel %vm830, %v681, 0.0
        %v841 = vadd.f32 %v839, %v840
        %v842 = vsel %vm830, %v754, 0.0
        %v843 = vadd.f32 %v841, %v842
        %v844 = vsel %vm830, %v827, 0.0
        %v845 = vadd.f32 %v843, %v844
        %v846 = vld [vmem:[%s2] sm:$0x1]
        %v848 = vlaneseq
        %v849 = vshrl.u32 %v848, 7
        %v850 = vsub.s32 0, %v849
        %v851 = vrot.slane %v846, %v850
        %v853 = vadd.f32 %v845, %v851
        %854 = vst.msk [vmem:[%s220] sm:$0xf] %vm830, %v853
        %s855 = sand.u32 %s113, 1
        %s856 = scalar_lea.sflag [#allocation4], %s855
        %s857 = sand.u32 %s113, 1
        %s858 = smul.addr %s857, 4
        %s859 = scalar_lea.vmem [#allocation7], %s858
        // Predicated region
        $region41: #{tpu_custom_call.1} parent=31 // pred_check
          %p860 = pneg %p123
        $region42: #{tpu_custom_call.1} parent=31 // pred_check_branch
          %862 = sbr.rel (%p860) target = $region44
        $region43: #{tpu_custom_call.1} parent=31 // pred_region
          %s864 = ssub.s32 64, 64
          %865 = vsyncadd %s856, %s864
          %s866 = sadd.s32 %s26, %s25
          %s867 = smul.addr %s866, 64
          %s868 = scalar_lea.hbm %s3, %s867
          %s870 = sshll.u32 %s859, 4
          %s871 = int_to_ptr.vmem [resolvable:$true] %s870
          %873 = dma.vmem_to_hbm [thread:$0]  %s871, 64, %s868, %s856
        $region44: #{tpu_custom_call.1} parent=31 // pred_fallthru
          _
      $region32: #{tpu_custom_call.1} parent=5 // pred_fallthru
        _
      %p874 = scmp.le.s32.totalorder 2, %s16
      // Predicated region
      $region45: #{tpu_custom_call.1} parent=5 // pred_check
        %p875 = pneg %p874
      $region46: #{tpu_custom_call.1} parent=5 // pred_check_branch
        %877 = sbr.rel (%p875) target = $region48
      $region47: #{tpu_custom_call.1} parent=5 // pred_region
        %s878 = ssub.s32 %s16, 2
        // Predicated region
        $region49: #{tpu_custom_call.1} parent=47 // pred_check
          %p879 = pneg %p129
        $region50: #{tpu_custom_call.1} parent=47 // pred_check_branch
          %881 = sbr.rel (%p879) target = $region52
        $region51: #{tpu_custom_call.1} parent=47 // pred_region
          %s882 = sand.u32 %s114, 1
          %s883 = scalar_lea.sflag [#allocation4], %s882
          %s884 = sand.u32 %s114, 1
          %s885 = smul.addr %s884, 4
          %s886 = scalar_lea.vmem [#allocation7], %s885
          %887 = dma.done %s883, 64
        $region52: #{tpu_custom_call.1} parent=47 // pred_fallthru
          _
      $region48: #{tpu_custom_call.1} parent=5 // pred_fallthru
        _
    $region6: #{tpu_custom_call.1} parent=1 // loop_footer
      %s20 = sadd.s32 1, %s16
    $region7: #{tpu_custom_call.1} parent=1 // loop_footer_branch
      %15 = sbr.rel target = $region3
    $region8: #{tpu_custom_call.1} parent=1 // loop_exit
      _
    %888 = vsyncpa [#allocation3], 1
    %s889 = scalar_lea.sflag [#allocation3], 1
    %890 = vsyncpa %s889, 1
    %891 = vsyncpa [#allocation6], 1
    %892 = vsyncpa [#allocation4], 1
    %s893 = scalar_lea.sflag [#allocation4], 1
    %894 = vsyncpa %s893, 1

</llo_original>
